<compile_context>
chip_gen: v5e
topology: v5e:2x2
jax: 0.10.0
libtpu: 0.0.40
codegen_flags: <defaults>
</compile_context>

<pallas_src>
import math

import jax
import jax.numpy as jnp
import numpy as np
from jax.experimental import pallas as pl
from jax.experimental.pallas import tpu as pltpu


def _round_up(n, m):
    return ((n + m - 1) // m) * m


def tft_kernel(x_ref, xlast_ref, We_ref, be_ref, Wq_ref, bq_ref,
               Wk_ref, bk_ref, Wv_ref, bv_ref,
               W1a_ref, W1b_ref, b1_ref, W2_ref, b2_ref, o_ref):
    bt, T, Dp = x_ref.shape
    d_model = We_ref.shape[1]
    inv_sqrt_d = 1.0 / math.sqrt(d_model)

    def mm(a, w_ref):
        # MXU matmul; cast inputs to the weight dtype (f32 or bf16), f32 acc.
        return jnp.dot(a.astype(w_ref.dtype), w_ref[...],
                       preferred_element_type=jnp.float32)

    # ---- Embedding over the whole (B_TILE*T) slab: large-M MXU matmul ------
    x_flat = x_ref[...].reshape(bt * T, Dp)            # leading-dim merge: free
    xe = mm(x_flat, We_ref) + be_ref[...]              # (bt*T, d_model)

    # last timestep embedding recomputed from x[:, -1, :] (dense layout; avoids
    # a stride-T sublane gather out of the flattened xe slab).
    x_last = xlast_ref[...]                            # (bt, Dp)
    last_embed = mm(x_last, We_ref) + be_ref[...]      # (bt, d_model)

    # ---- Q / K / V ----------------------------------------------------------
    # 1/sqrt(d) folded into q: cheaper than scaling (bt, T, 1) scores.
    q = (mm(last_embed, Wq_ref) + bq_ref[...]) * inv_sqrt_d   # (bt, d_model)
    k = (mm(xe, Wk_ref) + bk_ref[...]).reshape(bt, T, d_model)
    v = (mm(xe, Wv_ref) + bv_ref[...]).reshape(bt, T, d_model)

    # ---- Single-query attention on VPU/XLU (M=1 matmuls would use a single
    # row of the 128/256-wide systolic array). -------------------------------
    scores = jnp.sum(q[:, None, :] * k, axis=-1, keepdims=True)   # (bt, T, 1)
    m = jnp.max(scores, axis=1, keepdims=True)         # (bt, 1, 1)
    e = jnp.exp(scores - m)                            # (bt, T, 1)  f32
    denom = jnp.sum(e, axis=1, keepdims=True)          # (bt, 1, 1)
    w = e * pl.reciprocal(denom, approx=True)          # softmax (EUP recip)
    # attn_drop / ffn dropout: identity in eval mode.
    context = jnp.sum(w * v, axis=1)                   # (bt, d_model)

    # ---- FFN: concat eliminated via split W1 --------------------------------
    h = jnp.maximum(
        mm(context, W1a_ref) + mm(last_embed, W1b_ref) + b1_ref[...], 0.0)
    delta = mm(h, W2_ref) + b2_ref[...]                # (bt, Dp)

    # Residual on the last raw input step (pad lanes of x_last/W2/b2 are 0).
    o_ref[...] = (x_last + delta).astype(o_ref.dtype)


def tft_forward(x, params, *, b_tile=128, mxu_dtype=jnp.float32):
    """x: (B, T, input_dim) float32 -> (B, input_dim) float32."""
    B, T, d_in = x.shape
    d_model = params["We"].shape[1]
    d_ff = params["W1"].shape[1]

    # Lane-dense feature pad; batch pad to a sublane-friendly tile size.
    Dp = _round_up(d_in, 128)
    b_tile = max(8, min(b_tile, _round_up(B, 8)))
    Bp = _round_up(B, b_tile)
    n_steps = Bp // b_tile
    # NOTE: for v7x keep n_steps >= 2 at realistic B so both TensorCores get
    # work; the batch grid axis is marked "parallel" below.

    xp = jnp.pad(x.astype(jnp.float32), ((0, Bp - B), (0, 0), (0, Dp - d_in)))
    x_last = xp[:, T - 1, :]                                        # (Bp, Dp)

    wt = lambda w: w.astype(mxu_dtype)
    We = wt(jnp.pad(params["We"], ((0, Dp - d_in), (0, 0))))        # (Dp, dm)
    W2 = wt(jnp.pad(params["W2"], ((0, 0), (0, Dp - d_in))))        # (dff, Dp)
    b2 = jnp.pad(params["b2"], ((0, 0), (0, Dp - d_in)))            # (1, Dp)
    W1a = wt(params["W1"][:d_model, :])                             # context part
    W1b = wt(params["W1"][d_model:, :])                             # last_embed part
    Wq, Wk, Wv = wt(params["Wq"]), wt(params["Wk"]), wt(params["Wv"])
    be, bq, bk, bv, b1 = (params["be"], params["bq"], params["bk"],
                          params["bv"], params["b1"])

    def full_spec(a):
        n = a.ndim
        return pl.BlockSpec(a.shape, lambda b: (0,) * n)

    # Advisory cost estimate so XLA schedules this call sensibly.
    flops = int(
        2 * Bp * T * (Dp * d_model + 2 * d_model * d_model)         # embed, K, V
        + 2 * Bp * (Dp * d_model + d_model * d_model)               # last_embed, Q
        + 4 * Bp * T * d_model                                      # attention
        + 2 * Bp * (2 * d_model * d_ff + d_ff * Dp))                # FFN
    weight_bytes = sum(int(a.size) * a.dtype.itemsize for a in
                       (We, be, Wq, bq, Wk, bk, Wv, bv, W1a, W1b, b1, W2, b2))
    bytes_accessed = int(xp.size * 4 + x_last.size * 4 + weight_bytes + Bp * Dp * 4)
    cost = pl.CostEstimate(flops=flops,
                           transcendentals=int(Bp * T + Bp),
                           bytes_accessed=bytes_accessed)

    out = pl.pallas_call(
        tft_kernel,
        out_shape=jax.ShapeDtypeStruct((Bp, Dp), jnp.float32),
        grid=(n_steps,),
        in_specs=[
            pl.BlockSpec((b_tile, T, Dp), lambda b: (b, 0, 0)),     # x slab
            pl.BlockSpec((b_tile, Dp), lambda b: (b, 0)),           # x[:, -1, :]
            full_spec(We), full_spec(be),
            full_spec(Wq), full_spec(bq),
            full_spec(Wk), full_spec(bk),
            full_spec(Wv), full_spec(bv),
            full_spec(W1a), full_spec(W1b), full_spec(b1),
            full_spec(W2), full_spec(b2),
        ],
        out_specs=pl.BlockSpec((b_tile, Dp), lambda b: (b, 0)),
        compiler_params=pltpu.CompilerParams(
            dimension_semantics=("parallel",)),
        cost_estimate=cost,
    )(xp, x_last, We, be, Wq, bq, Wk, bk, Wv, bv, W1a, W1b, b1, W2, b2)

    return out[:B, :d_in]


def tft_reference(x, params):
    """Pure-JAX reference of the PyTorch forward (eval mode)."""
    d_model = params["We"].shape[1]
    xe = x @ params["We"] + params["be"]                    # (B, T, d_model)
    q = xe[:, -1:, :] @ params["Wq"] + params["bq"]         # (B, 1, d_model)
    k = xe @ params["Wk"] + params["bk"]                    # (B, T, d_model)
    v = xe @ params["Wv"] + params["bv"]                    # (B, T, d_model)
    scores = (q @ jnp.swapaxes(k, -2, -1)) / math.sqrt(d_model)
    w = jax.nn.softmax(scores, axis=-1)
    context = (w @ v)[:, 0, :]                              # (B, d_model)
    last_embed = xe[:, -1, :]
    rep = jnp.concatenate([context, last_embed], axis=-1)
    h = jnp.maximum(rep @ params["W1"] + params["b1"], 0.0)
    delta = h @ params["W2"] + params["b2"]
    return x[:, -1, :] + delta


def init_params(key, input_dim=4, d_model=32, d_ff=64):
    keys = jax.random.split(key, 12)

    def lin(kw, kb, fan_in, fan_out):
        bound = 1.0 / math.sqrt(fan_in)
        W = jax.random.uniform(kw, (fan_in, fan_out), jnp.float32, -bound, bound)
        b = jax.random.uniform(kb, (1, fan_out), jnp.float32, -bound, bound)
        return W, b

    We, be = lin(keys[0], keys[1], input_dim, d_model)
    Wq, bq = lin(keys[2], keys[3], d_model, d_model)
    Wk, bk = lin(keys[4], keys[5], d_model, d_model)
    Wv, bv = lin(keys[6], keys[7], d_model, d_model)
    W1, b1 = lin(keys[8], keys[9], 2 * d_model, d_ff)
    W2, b2 = lin(keys[10], keys[11], d_ff, input_dim)
    return dict(We=We, be=be, Wq=Wq, bq=bq, Wk=Wk, bk=bk, Wv=Wv, bv=bv,
                W1=W1, b1=b1, W2=W2, b2=b2)


if __name__ == "__main__":
    B, T, input_dim, d_model, d_ff = 2, 8, 4, 32, 64
    key = jax.random.PRNGKey(0)
    kx, kx2, kp = jax.random.split(key, 3)
    x = jax.random.normal(kx, (B, T, input_dim), jnp.float32)
    params = init_params(kp, input_dim, d_model, d_ff)

    y_ref = tft_reference(x, params)

    # f32 MXU inputs (valid on all generations).
    y = tft_forward(x, params)
    jax.block_until_ready(y)
    assert y.shape == (B, input_dim)
    np.testing.assert_allclose(np.asarray(y), np.asarray(y_ref),
                               atol=2e-3, rtol=2e-3)

    # Multi-step grid + batch/feature padding path (B not a tile multiple).
    B2 = 20
    x2 = jax.random.normal(kx2, (B2, T, input_dim), jnp.float32)
    y2 = tft_forward(x2, params, b_tile=8)
    jax.block_until_ready(y2)
    np.testing.assert_allclose(np.asarray(y2),
                               np.asarray(tft_reference(x2, params)),
                               atol=2e-3, rtol=2e-3)

    # bf16 MXU inputs (v6e/v7x recommendation); f32 accumulation + f32 softmax.
    y_bf16 = tft_forward(x, params, mxu_dtype=jnp.bfloat16)
    jax.block_until_ready(y_bf16)
    np.testing.assert_allclose(np.asarray(y_bf16), np.asarray(y_ref),
                               atol=1e-1, rtol=1e-1)

    print("KERNEL_OK")
</pallas_src>

<mosaic_0001>
module attributes {stable_mosaic.version = 11 : i64} {
  func.func @tft_kernel(%arg0: i32, %arg1: memref<8x8x128xf32, #tpu.memory_space<vmem>>, %arg2: memref<8x128xf32, #tpu.memory_space<vmem>>, %arg3: memref<128x32xf32, #tpu.memory_space<vmem>>, %arg4: memref<1x32xf32, #tpu.memory_space<vmem>>, %arg5: memref<32x32xf32, #tpu.memory_space<vmem>>, %arg6: memref<1x32xf32, #tpu.memory_space<vmem>>, %arg7: memref<32x32xf32, #tpu.memory_space<vmem>>, %arg8: memref<1x32xf32, #tpu.memory_space<vmem>>, %arg9: memref<32x32xf32, #tpu.memory_space<vmem>>, %arg10: memref<1x32xf32, #tpu.memory_space<vmem>>, %arg11: memref<32x64xf32, #tpu.memory_space<vmem>>, %arg12: memref<32x64xf32, #tpu.memory_space<vmem>>, %arg13: memref<1x64xf32, #tpu.memory_space<vmem>>, %arg14: memref<64x128xf32, #tpu.memory_space<vmem>>, %arg15: memref<1x128xf32, #tpu.memory_space<vmem>>, %arg16: memref<8x128xf32, #tpu.memory_space<vmem>>) attributes {dimension_semantics = [#tpu.dimension_semantics<parallel>], iteration_bounds = array<i64: 1>, scalar_prefetch = 0 : i64, scratch_operands = 0 : i64, tpu.core_type = #tpu.core_type<tc>, window_params = [{transform_indices = @transform_0, window_bounds = array<i64: 8, 8, 128>}, {transform_indices = @transform_1, window_bounds = array<i64: 8, 128>}, {pipeline_mode = #tpu.pipeline_mode<synchronous>, transform_indices = @transform_2, window_bounds = array<i64: 128, 32>}, {pipeline_mode = #tpu.pipeline_mode<synchronous>, transform_indices = @transform_3, window_bounds = array<i64: 1, 32>}, {pipeline_mode = #tpu.pipeline_mode<synchronous>, transform_indices = @transform_4, window_bounds = array<i64: 32, 32>}, {pipeline_mode = #tpu.pipeline_mode<synchronous>, transform_indices = @transform_5, window_bounds = array<i64: 1, 32>}, {pipeline_mode = #tpu.pipeline_mode<synchronous>, transform_indices = @transform_6, window_bounds = array<i64: 32, 32>}, {pipeline_mode = #tpu.pipeline_mode<synchronous>, transform_indices = @transform_7, window_bounds = array<i64: 1, 32>}, {pipeline_mode = #tpu.pipeline_mode<synchronous>, transform_indices = @transform_8, window_bounds = array<i64: 32, 32>}, {pipeline_mode = #tpu.pipeline_mode<synchronous>, transform_indices = @transform_9, window_bounds = array<i64: 1, 32>}, {pipeline_mode = #tpu.pipeline_mode<synchronous>, transform_indices = @transform_10, window_bounds = array<i64: 32, 64>}, {pipeline_mode = #tpu.pipeline_mode<synchronous>, transform_indices = @transform_11, window_bounds = array<i64: 32, 64>}, {pipeline_mode = #tpu.pipeline_mode<synchronous>, transform_indices = @transform_12, window_bounds = array<i64: 1, 64>}, {pipeline_mode = #tpu.pipeline_mode<synchronous>, transform_indices = @transform_13, window_bounds = array<i64: 64, 128>}, {pipeline_mode = #tpu.pipeline_mode<synchronous>, transform_indices = @transform_14, window_bounds = array<i64: 1, 128>}, {transform_indices = @transform_15, window_bounds = array<i64: 8, 128>}]} {
    %c0 = arith.constant 0 : index
    %c0_0 = arith.constant 0 : index
    %c0_1 = arith.constant 0 : index
    %0 = vector.load %arg1[%c0, %c0_0, %c0_1] : memref<8x8x128xf32, #tpu.memory_space<vmem>>, vector<8x8x128xf32>
    %1 = vector.shape_cast %0 : vector<8x8x128xf32> to vector<64x128xf32>
    %c0_2 = arith.constant 0 : index
    %c0_3 = arith.constant 0 : index
    %2 = vector.load %arg3[%c0_2, %c0_3] : memref<128x32xf32, #tpu.memory_space<vmem>>, vector<128x32xf32>
    %cst = arith.constant dense<0.000000e+00> : vector<64x32xf32>
    %3 = tpu.matmul %1, %2, %cst {dimension_numbers = #tpu.dot_dimension_numbers<[1], [0], [0], [1], [0, 0, 1, 1], [], []>} : vector<64x128xf32>, vector<128x32xf32>, vector<64x32xf32> -> vector<64x32xf32>
    %c0_4 = arith.constant 0 : index
    %c0_5 = arith.constant 0 : index
    %4 = vector.load %arg4[%c0_4, %c0_5] : memref<1x32xf32, #tpu.memory_space<vmem>>, vector<1x32xf32>
    %5 = vector.broadcast %4 : vector<1x32xf32> to vector<64x32xf32>
    %6 = arith.addf %3, %5 : vector<64x32xf32>
    %c0_6 = arith.constant 0 : index
    %c0_7 = arith.constant 0 : index
    %7 = vector.load %arg2[%c0_6, %c0_7] : memref<8x128xf32, #tpu.memory_space<vmem>>, vector<8x128xf32>
    %c0_8 = arith.constant 0 : index
    %c0_9 = arith.constant 0 : index
    %8 = vector.load %arg3[%c0_8, %c0_9] : memref<128x32xf32, #tpu.memory_space<vmem>>, vector<128x32xf32>
    %cst_10 = arith.constant dense<0.000000e+00> : vector<8x32xf32>
    %9 = tpu.matmul %7, %8, %cst_10 {dimension_numbers = #tpu.dot_dimension_numbers<[1], [0], [0], [1], [0, 0, 1, 1], [], []>} : vector<8x128xf32>, vector<128x32xf32>, vector<8x32xf32> -> vector<8x32xf32>
    %c0_11 = arith.constant 0 : index
    %c0_12 = arith.constant 0 : index
    %10 = vector.load %arg4[%c0_11, %c0_12] : memref<1x32xf32, #tpu.memory_space<vmem>>, vector<1x32xf32>
    %11 = vector.broadcast %10 : vector<1x32xf32> to vector<8x32xf32>
    %12 = arith.addf %9, %11 : vector<8x32xf32>
    %c0_13 = arith.constant 0 : index
    %c0_14 = arith.constant 0 : index
    %13 = vector.load %arg5[%c0_13, %c0_14] : memref<32x32xf32, #tpu.memory_space<vmem>>, vector<32x32xf32>
    %cst_15 = arith.constant dense<0.000000e+00> : vector<8x32xf32>
    %14 = tpu.matmul %12, %13, %cst_15 {dimension_numbers = #tpu.dot_dimension_numbers<[1], [0], [0], [1], [0, 0, 1, 1], [], []>} : vector<8x32xf32>, vector<32x32xf32>, vector<8x32xf32> -> vector<8x32xf32>
    %c0_16 = arith.constant 0 : index
    %c0_17 = arith.constant 0 : index
    %15 = vector.load %arg6[%c0_16, %c0_17] : memref<1x32xf32, #tpu.memory_space<vmem>>, vector<1x32xf32>
    %16 = vector.broadcast %15 : vector<1x32xf32> to vector<8x32xf32>
    %17 = arith.addf %14, %16 : vector<8x32xf32>
    %cst_18 = arith.constant 0.176776692 : f32
    %18 = vector.broadcast %cst_18 : f32 to vector<8x32xf32>
    %19 = arith.mulf %17, %18 : vector<8x32xf32>
    %c0_19 = arith.constant 0 : index
    %c0_20 = arith.constant 0 : index
    %20 = vector.load %arg7[%c0_19, %c0_20] : memref<32x32xf32, #tpu.memory_space<vmem>>, vector<32x32xf32>
    %cst_21 = arith.constant dense<0.000000e+00> : vector<64x32xf32>
    %21 = tpu.matmul %6, %20, %cst_21 {dimension_numbers = #tpu.dot_dimension_numbers<[1], [0], [0], [1], [0, 0, 1, 1], [], []>} : vector<64x32xf32>, vector<32x32xf32>, vector<64x32xf32> -> vector<64x32xf32>
    %c0_22 = arith.constant 0 : index
    %c0_23 = arith.constant 0 : index
    %22 = vector.load %arg8[%c0_22, %c0_23] : memref<1x32xf32, #tpu.memory_space<vmem>>, vector<1x32xf32>
    %23 = vector.broadcast %22 : vector<1x32xf32> to vector<64x32xf32>
    %24 = arith.addf %21, %23 : vector<64x32xf32>
    %25 = vector.shape_cast %24 : vector<64x32xf32> to vector<8x8x32xf32>
    %c0_24 = arith.constant 0 : index
    %c0_25 = arith.constant 0 : index
    %26 = vector.load %arg9[%c0_24, %c0_25] : memref<32x32xf32, #tpu.memory_space<vmem>>, vector<32x32xf32>
    %cst_26 = arith.constant dense<0.000000e+00> : vector<64x32xf32>
    %27 = tpu.matmul %6, %26, %cst_26 {dimension_numbers = #tpu.dot_dimension_numbers<[1], [0], [0], [1], [0, 0, 1, 1], [], []>} : vector<64x32xf32>, vector<32x32xf32>, vector<64x32xf32> -> vector<64x32xf32>
    %c0_27 = arith.constant 0 : index
    %c0_28 = arith.constant 0 : index
    %28 = vector.load %arg10[%c0_27, %c0_28] : memref<1x32xf32, #tpu.memory_space<vmem>>, vector<1x32xf32>
    %29 = vector.broadcast %28 : vector<1x32xf32> to vector<64x32xf32>
    %30 = arith.addf %27, %29 : vector<64x32xf32>
    %31 = vector.shape_cast %30 : vector<64x32xf32> to vector<8x8x32xf32>
    %32 = vector.shape_cast %19 : vector<8x32xf32> to vector<8x1x32xf32>
    %33 = vector.broadcast %32 : vector<8x1x32xf32> to vector<8x8x32xf32>
    %34 = arith.mulf %33, %25 : vector<8x8x32xf32>
    %cst_29 = arith.constant dense<0.000000e+00> : vector<8x8xf32>
    %35 = vector.multi_reduction <add>, %34, %cst_29 [2] : vector<8x8x32xf32> to vector<8x8xf32>
    %36 = vector.shape_cast %35 : vector<8x8xf32> to vector<8x8x1xf32>
    %cst_30 = arith.constant dense<0xFF800000> : vector<8x1xf32>
    %37 = vector.multi_reduction <maximumf>, %36, %cst_30 [1] : vector<8x8x1xf32> to vector<8x1xf32>
    %38 = vector.shape_cast %37 : vector<8x1xf32> to vector<8x1x1xf32>
    %39 = vector.broadcast %38 : vector<8x1x1xf32> to vector<8x8x1xf32>
    %40 = arith.subf %36, %39 : vector<8x8x1xf32>
    %41 = math.exp %40 : vector<8x8x1xf32>
    %cst_31 = arith.constant dense<0.000000e+00> : vector<8x1xf32>
    %42 = vector.multi_reduction <add>, %41, %cst_31 [1] : vector<8x8x1xf32> to vector<8x1xf32>
    %43 = vector.shape_cast %42 : vector<8x1xf32> to vector<8x1x1xf32>
    %44 = tpu.reciprocal %43 {approx = true} : vector<8x1x1xf32> -> vector<8x1x1xf32>
    %45 = vector.broadcast %44 : vector<8x1x1xf32> to vector<8x8x1xf32>
    %46 = arith.mulf %41, %45 : vector<8x8x1xf32>
    %47 = vector.broadcast %46 : vector<8x8x1xf32> to vector<8x8x32xf32>
    %48 = arith.mulf %47, %31 : vector<8x8x32xf32>
    %cst_32 = arith.constant dense<0.000000e+00> : vector<8x32xf32>
    %49 = vector.multi_reduction <add>, %48, %cst_32 [1] : vector<8x8x32xf32> to vector<8x32xf32>
    %c0_33 = arith.constant 0 : index
    %c0_34 = arith.constant 0 : index
    %50 = vector.load %arg11[%c0_33, %c0_34] : memref<32x64xf32, #tpu.memory_space<vmem>>, vector<32x64xf32>
    %cst_35 = arith.constant dense<0.000000e+00> : vector<8x64xf32>
    %51 = tpu.matmul %49, %50, %cst_35 {dimension_numbers = #tpu.dot_dimension_numbers<[1], [0], [0], [1], [0, 0, 1, 1], [], []>} : vector<8x32xf32>, vector<32x64xf32>, vector<8x64xf32> -> vector<8x64xf32>
    %c0_36 = arith.constant 0 : index
    %c0_37 = arith.constant 0 : index
    %52 = vector.load %arg12[%c0_36, %c0_37] : memref<32x64xf32, #tpu.memory_space<vmem>>, vector<32x64xf32>
    %cst_38 = arith.constant dense<0.000000e+00> : vector<8x64xf32>
    %53 = tpu.matmul %12, %52, %cst_38 {dimension_numbers = #tpu.dot_dimension_numbers<[1], [0], [0], [1], [0, 0, 1, 1], [], []>} : vector<8x32xf32>, vector<32x64xf32>, vector<8x64xf32> -> vector<8x64xf32>
    %54 = arith.addf %51, %53 : vector<8x64xf32>
    %c0_39 = arith.constant 0 : index
    %c0_40 = arith.constant 0 : index
    %55 = vector.load %arg13[%c0_39, %c0_40] : memref<1x64xf32, #tpu.memory_space<vmem>>, vector<1x64xf32>
    %56 = vector.broadcast %55 : vector<1x64xf32> to vector<8x64xf32>
    %57 = arith.addf %54, %56 : vector<8x64xf32>
    %cst_41 = arith.constant 0.000000e+00 : f32
    %58 = vector.broadcast %cst_41 : f32 to vector<8x64xf32>
    %59 = arith.maximumf %57, %58 : vector<8x64xf32>
    %c0_42 = arith.constant 0 : index
    %c0_43 = arith.constant 0 : index
    %60 = vector.load %arg14[%c0_42, %c0_43] : memref<64x128xf32, #tpu.memory_space<vmem>>, vector<64x128xf32>
    %cst_44 = arith.constant dense<0.000000e+00> : vector<8x128xf32>
    %61 = tpu.matmul %59, %60, %cst_44 {dimension_numbers = #tpu.dot_dimension_numbers<[1], [0], [0], [1], [0, 0, 1, 1], [], []>} : vector<8x64xf32>, vector<64x128xf32>, vector<8x128xf32> -> vector<8x128xf32>
    %c0_45 = arith.constant 0 : index
    %c0_46 = arith.constant 0 : index
    %62 = vector.load %arg15[%c0_45, %c0_46] : memref<1x128xf32, #tpu.memory_space<vmem>>, vector<1x128xf32>
    %63 = vector.broadcast %62 : vector<1x128xf32> to vector<8x128xf32>
    %64 = arith.addf %61, %63 : vector<8x128xf32>
    %65 = arith.addf %7, %64 : vector<8x128xf32>
    %c0_47 = arith.constant 0 : index
    %c0_48 = arith.constant 0 : index
    %66 = vector.load %arg16[%c0_47, %c0_48] : memref<8x128xf32, #tpu.memory_space<vmem>>, vector<8x128xf32>
    tpu.vector_store %arg16[%c0_47, %c0_48], %65 {strides = array<i32>} : memref<8x128xf32, #tpu.memory_space<vmem>>, vector<8x128xf32>,
    return
  }
  func.func @transform_0(%arg0: i32) -> (i32, i32, i32) {
    %c0_i32 = arith.constant 0 : i32
    %c0_i32_0 = arith.constant 0 : i32
    %c0_i32_1 = arith.constant 0 : i32
    return %arg0, %c0_i32, %c0_i32_0 : i32, i32, i32
  }
  func.func @transform_1(%arg0: i32) -> (i32, i32) {
    %c0_i32 = arith.constant 0 : i32
    %c0_i32_0 = arith.constant 0 : i32
    return %arg0, %c0_i32 : i32, i32
  }
  func.func @transform_2(%arg0: i32) -> (i32, i32) {
    %c0_i32 = arith.constant 0 : i32
    %c0_i32_0 = arith.constant 0 : i32
    %c0_i32_1 = arith.constant 0 : i32
    return %c0_i32, %c0_i32_0 : i32, i32
  }
  func.func @transform_3(%arg0: i32) -> (i32, i32) {
    %c0_i32 = arith.constant 0 : i32
    %c0_i32_0 = arith.constant 0 : i32
    %c0_i32_1 = arith.constant 0 : i32
    return %c0_i32, %c0_i32_0 : i32, i32
  }
  func.func @transform_4(%arg0: i32) -> (i32, i32) {
    %c0_i32 = arith.constant 0 : i32
    %c0_i32_0 = arith.constant 0 : i32
    %c0_i32_1 = arith.constant 0 : i32
    return %c0_i32, %c0_i32_0 : i32, i32
  }
  func.func @transform_5(%arg0: i32) -> (i32, i32) {
    %c0_i32 = arith.constant 0 : i32
    %c0_i32_0 = arith.constant 0 : i32
    %c0_i32_1 = arith.constant 0 : i32
    return %c0_i32, %c0_i32_0 : i32, i32
  }
  func.func @transform_6(%arg0: i32) -> (i32, i32) {
    %c0_i32 = arith.constant 0 : i32
    %c0_i32_0 = arith.constant 0 : i32
    %c0_i32_1 = arith.constant 0 : i32
    return %c0_i32, %c0_i32_0 : i32, i32
  }
  func.func @transform_7(%arg0: i32) -> (i32, i32) {
    %c0_i32 = arith.constant 0 : i32
    %c0_i32_0 = arith.constant 0 : i32
    %c0_i32_1 = arith.constant 0 : i32
    return %c0_i32, %c0_i32_0 : i32, i32
  }
  func.func @transform_8(%arg0: i32) -> (i32, i32) {
    %c0_i32 = arith.constant 0 : i32
    %c0_i32_0 = arith.constant 0 : i32
    %c0_i32_1 = arith.constant 0 : i32
    return %c0_i32, %c0_i32_0 : i32, i32
  }
  func.func @transform_9(%arg0: i32) -> (i32, i32) {
    %c0_i32 = arith.constant 0 : i32
    %c0_i32_0 = arith.constant 0 : i32
    %c0_i32_1 = arith.constant 0 : i32
    return %c0_i32, %c0_i32_0 : i32, i32
  }
  func.func @transform_10(%arg0: i32) -> (i32, i32) {
    %c0_i32 = arith.constant 0 : i32
    %c0_i32_0 = arith.constant 0 : i32
    %c0_i32_1 = arith.constant 0 : i32
    return %c0_i32, %c0_i32_0 : i32, i32
  }
  func.func @transform_11(%arg0: i32) -> (i32, i32) {
    %c0_i32 = arith.constant 0 : i32
    %c0_i32_0 = arith.constant 0 : i32
    %c0_i32_1 = arith.constant 0 : i32
    return %c0_i32, %c0_i32_0 : i32, i32
  }
  func.func @transform_12(%arg0: i32) -> (i32, i32) {
    %c0_i32 = arith.constant 0 : i32
    %c0_i32_0 = arith.constant 0 : i32
    %c0_i32_1 = arith.constant 0 : i32
    return %c0_i32, %c0_i32_0 : i32, i32
  }
  func.func @transform_13(%arg0: i32) -> (i32, i32) {
    %c0_i32 = arith.constant 0 : i32
    %c0_i32_0 = arith.constant 0 : i32
    %c0_i32_1 = arith.constant 0 : i32
    return %c0_i32, %c0_i32_0 : i32, i32
  }
  func.func @transform_14(%arg0: i32) -> (i32, i32) {
    %c0_i32 = arith.constant 0 : i32
    %c0_i32_0 = arith.constant 0 : i32
    %c0_i32_1 = arith.constant 0 : i32
    return %c0_i32, %c0_i32_0 : i32, i32
  }
  func.func @transform_15(%arg0: i32) -> (i32, i32) {
    %c0_i32 = arith.constant 0 : i32
    %c0_i32_0 = arith.constant 0 : i32
    return %arg0, %c0_i32 : i32, i32
  }
}

</mosaic_0001>

<llo_original>
// kernel: tpu_custom_call.1
$region0: #{tpu_custom_call.1}
  #allocation0 [shape = 'u32[]', space=smem, size = 0x4, offset = 0x4, fixed_abs, tag = 'smem constant byte address 0x4 - core index']
  #allocation1 [shape = 'u32[72,128]{1,0:T(1,128)}', space=vmem, size = 0x9000, scoped, tag = 'internal scratch']
  %s0 = inlined_call_operand.vmem [shape: f32[8,8,128], index: 0, kind: input, shape index: {}]
  %s1 = inlined_call_operand.hbm [shape: f32[8,128], index: 1, kind: input, shape index: {}]
  %s2 = inlined_call_operand.vmem [shape: f32[128,32], index: 2, kind: input, shape index: {}]
  %s3 = inlined_call_operand.vmem [shape: f32[1,32], index: 3, kind: input, shape index: {}]
  %s4 = inlined_call_operand.vmem [shape: f32[32,32], index: 4, kind: input, shape index: {}]
  %s5 = inlined_call_operand.vmem [shape: f32[1,32], index: 5, kind: input, shape index: {}]
  %s6 = inlined_call_operand.hbm [shape: f32[32,32], index: 6, kind: input, shape index: {}]
  %s7 = inlined_call_operand.vmem [shape: f32[1,32], index: 7, kind: input, shape index: {}]
  %s8 = inlined_call_operand.hbm [shape: f32[32,32], index: 8, kind: input, shape index: {}]
  %s9 = inlined_call_operand.vmem [shape: f32[1,32], index: 9, kind: input, shape index: {}]
  %s10 = inlined_call_operand.hbm [shape: f32[32,64], index: 10, kind: input, shape index: {}]
  %s11 = inlined_call_operand.hbm [shape: f32[32,64], index: 11, kind: input, shape index: {}]
  %s12 = inlined_call_operand.vmem [shape: f32[1,64], index: 12, kind: input, shape index: {}]
  %s13 = inlined_call_operand.vmem [shape: f32[64,128], index: 13, kind: input, shape index: {}]
  %s14 = inlined_call_operand.vmem [shape: f32[1,128], index: 14, kind: input, shape index: {}]
  %s15 = inlined_call_operand.hbm [shape: f32[8,128], index: 15, kind: output, shape index: {}]
  %s16 = sld [smem:[#allocation0]]
  $region90: #{tpu_custom_call.1} parent=0
    _
  %s18 = ssub.s32 1, %s16
  %s19 = scalar_select 0, %s18, %s16
  $region1: #{tpu_custom_call.1} parent=0
    #allocation2 [shape = 'u8[4096]{0}', space=vmem, size = 0x1000, scoped, tag = 'input window, operand 1, single buffered']
    #allocation3 [shape = 's32[1]{0}', space=sflag, size = 0x4, scoped, tag = 'scoped memory for tpu_custom_call.1']
    #allocation4 [shape = 's32[1]{0}', space=sflag, size = 0x4, scoped, tag = 'scoped memory for tpu_custom_call.1']
    #allocation5 [shape = 'u8[16384]{0}', space=vmem, size = 0x4000, scoped, tag = 'input window, operand 6, single buffered']
    #allocation6 [shape = 's32[1]{0}', space=sflag, size = 0x4, scoped, tag = 'scoped memory for tpu_custom_call.1']
    #allocation7 [shape = 'u8[16384]{0}', space=vmem, size = 0x4000, scoped, tag = 'input window, operand 8, single buffered']
    #allocation8 [shape = 'u8[16384]{0}', space=vmem, size = 0x4000, scoped, tag = 'input window, operand 10, single buffered']
    #allocation9 [shape = 's32[1]{0}', space=sflag, size = 0x4, scoped, tag = 'scoped memory for tpu_custom_call.1']
    #allocation10 [shape = 'u8[16384]{0}', space=vmem, size = 0x4000, scoped, tag = 'input window, operand 11, single buffered']
    #allocation11 [shape = 'u8[4096]{0}', space=vmem, size = 0x1000, scoped, tag = 'output window, operand 0, single buffered']
    %20 = vsyncpa [#allocation3], 0
    %21 = vsyncpa [#allocation6], 0
    %22 = vsyncpa [#allocation9], 0
    %23 = vsyncpa [#allocation4], 0
    // Predicated region
    $region2: #{tpu_custom_call.1} parent=1 // pred_check
      _
    $region3: #{tpu_custom_call.1} parent=1 // pred_check_branch
      %25 = sbr.rel (0) target = $region5
    $region4: #{tpu_custom_call.1} parent=1 // pred_region
      _
    $region5: #{tpu_custom_call.1} parent=1 // pred_fallthru
      _
    // Predicated region
    $region6: #{tpu_custom_call.1} parent=1 // pred_check
      _
    $region7: #{tpu_custom_call.1} parent=1 // pred_check_branch
      %27 = sbr.rel (0) target = $region9
    $region8: #{tpu_custom_call.1} parent=1 // pred_region
      %29 = vsyncadd [#allocation3], 0
      %s31 = sshll.u32 %s1, 4
      %s32 = int_to_ptr.hbm [resolvable:$true] %s31
      %s33 = sshll.u32 [#allocation2], 4
      %s34 = int_to_ptr.vmem [resolvable:$true] %s33
      %36 = dma.hbm_to_vmem [thread:$0]  %s32, 128, %s34, [#allocation3]
    $region9: #{tpu_custom_call.1} parent=1 // pred_fallthru
      _
    // Predicated region
    $region10: #{tpu_custom_call.1} parent=1 // pred_check
      _
    $region11: #{tpu_custom_call.1} parent=1 // pred_check_branch
      %38 = sbr.rel (0) target = $region13
    $region12: #{tpu_custom_call.1} parent=1 // pred_region
      _
    $region13: #{tpu_custom_call.1} parent=1 // pred_fallthru
      _
    // Predicated region
    $region14: #{tpu_custom_call.1} parent=1 // pred_check
      _
    $region15: #{tpu_custom_call.1} parent=1 // pred_check_branch
      %40 = sbr.rel (0) target = $region17
    $region16: #{tpu_custom_call.1} parent=1 // pred_region
      _
    $region17: #{tpu_custom_call.1} parent=1 // pred_fallthru
      _
    // Predicated region
    $region18: #{tpu_custom_call.1} parent=1 // pred_check
      _
    $region19: #{tpu_custom_call.1} parent=1 // pred_check_branch
      %42 = sbr.rel (0) target = $region21
    $region20: #{tpu_custom_call.1} parent=1 // pred_region
      _
    $region21: #{tpu_custom_call.1} parent=1 // pred_fallthru
      _
    // Predicated region
    $region22: #{tpu_custom_call.1} parent=1 // pred_check
      _
    $region23: #{tpu_custom_call.1} parent=1 // pred_check_branch
      %44 = sbr.rel (0) target = $region25
    $region24: #{tpu_custom_call.1} parent=1 // pred_region
      _
    $region25: #{tpu_custom_call.1} parent=1 // pred_fallthru
      _
    // Predicated region
    $region26: #{tpu_custom_call.1} parent=1 // pred_check
      _
    $region27: #{tpu_custom_call.1} parent=1 // pred_check_branch
      %46 = sbr.rel (0) target = $region29
    $region28: #{tpu_custom_call.1} parent=1 // pred_region
      %48 = vsyncadd [#allocation6], 0
      %s49 = sshll.u32 %s6, 4
      %s50 = int_to_ptr.hbm [resolvable:$true] %s49
      %s51 = sshll.u32 [#allocation5], 4
      %s52 = int_to_ptr.vmem [resolvable:$true] %s51
      %57 = dma.hbm_to_vmem [thread:$0]  %s50, 512, %s52, [#allocation6], 128, 128, 8
    $region29: #{tpu_custom_call.1} parent=1 // pred_fallthru
      _
    // Predicated region
    $region30: #{tpu_custom_call.1} parent=1 // pred_check
      _
    $region31: #{tpu_custom_call.1} parent=1 // pred_check_branch
      %59 = sbr.rel (0) target = $region33
    $region32: #{tpu_custom_call.1} parent=1 // pred_region
      _
    $region33: #{tpu_custom_call.1} parent=1 // pred_fallthru
      _
    // Predicated region
    $region34: #{tpu_custom_call.1} parent=1 // pred_check
      _
    $region35: #{tpu_custom_call.1} parent=1 // pred_check_branch
      %61 = sbr.rel (0) target = $region37
    $region36: #{tpu_custom_call.1} parent=1 // pred_region
      %63 = vsyncadd [#allocation6], 0
      %s64 = sshll.u32 %s8, 4
      %s65 = int_to_ptr.hbm [resolvable:$true] %s64
      %s66 = sshll.u32 [#allocation7], 4
      %s67 = int_to_ptr.vmem [resolvable:$true] %s66
      %72 = dma.hbm_to_vmem [thread:$0]  %s65, 512, %s67, [#allocation6], 128, 128, 8
    $region37: #{tpu_custom_call.1} parent=1 // pred_fallthru
      _
    // Predicated region
    $region38: #{tpu_custom_call.1} parent=1 // pred_check
      _
    $region39: #{tpu_custom_call.1} parent=1 // pred_check_branch
      %74 = sbr.rel (0) target = $region41
    $region40: #{tpu_custom_call.1} parent=1 // pred_region
      _
    $region41: #{tpu_custom_call.1} parent=1 // pred_fallthru
      _
    // Predicated region
    $region42: #{tpu_custom_call.1} parent=1 // pred_check
      _
    $region43: #{tpu_custom_call.1} parent=1 // pred_check_branch
      %76 = sbr.rel (0) target = $region45
    $region44: #{tpu_custom_call.1} parent=1 // pred_region
      %78 = vsyncadd [#allocation9], 0
      %s79 = sshll.u32 %s10, 4
      %s80 = int_to_ptr.hbm [resolvable:$true] %s79
      %s81 = sshll.u32 [#allocation8], 4
      %s82 = int_to_ptr.vmem [resolvable:$true] %s81
      %87 = dma.hbm_to_vmem [thread:$0]  %s80, 512, %s82, [#allocation9], 128, 128, 8
    $region45: #{tpu_custom_call.1} parent=1 // pred_fallthru
      _
    // Predicated region
    $region46: #{tpu_custom_call.1} parent=1 // pred_check
      _
    $region47: #{tpu_custom_call.1} parent=1 // pred_check_branch
      %89 = sbr.rel (0) target = $region49
    $region48: #{tpu_custom_call.1} parent=1 // pred_region
      %91 = vsyncadd [#allocation9], 0
      %s92 = sshll.u32 %s11, 4
      %s93 = int_to_ptr.hbm [resolvable:$true] %s92
      %s94 = sshll.u32 [#allocation10], 4
      %s95 = int_to_ptr.vmem [resolvable:$true] %s94
      %100 = dma.hbm_to_vmem [thread:$0]  %s93, 512, %s95, [#allocation9], 128, 128, 8
    $region49: #{tpu_custom_call.1} parent=1 // pred_fallthru
      _
    // Predicated region
    $region50: #{tpu_custom_call.1} parent=1 // pred_check
      _
    $region51: #{tpu_custom_call.1} parent=1 // pred_check_branch
      %102 = sbr.rel (0) target = $region53
    $region52: #{tpu_custom_call.1} parent=1 // pred_region
      _
    $region53: #{tpu_custom_call.1} parent=1 // pred_fallthru
      _
    // Predicated region
    $region54: #{tpu_custom_call.1} parent=1 // pred_check
      _
    $region55: #{tpu_custom_call.1} parent=1 // pred_check_branch
      %104 = sbr.rel (0) target = $region57
    $region56: #{tpu_custom_call.1} parent=1 // pred_region
      _
    $region57: #{tpu_custom_call.1} parent=1 // pred_fallthru
      _
    // Predicated region
    $region58: #{tpu_custom_call.1} parent=1 // pred_check
      _
    $region59: #{tpu_custom_call.1} parent=1 // pred_check_branch
      %106 = sbr.rel (0) target = $region61
    $region60: #{tpu_custom_call.1} parent=1 // pred_region
      _
    $region61: #{tpu_custom_call.1} parent=1 // pred_fallthru
      _
    // Predicated region
    $region62: #{tpu_custom_call.1} parent=1 // pred_check
      _
    $region63: #{tpu_custom_call.1} parent=1 // pred_check_branch
      %108 = sbr.rel (0) target = $region65
    $region64: #{tpu_custom_call.1} parent=1 // pred_region
      %110 = dma.done [#allocation3], 128
    $region65: #{tpu_custom_call.1} parent=1 // pred_fallthru
      _
    // Predicated region
    $region66: #{tpu_custom_call.1} parent=1 // pred_check
      _
    $region67: #{tpu_custom_call.1} parent=1 // pred_check_branch
      %112 = sbr.rel (0) target = $region69
    $region68: #{tpu_custom_call.1} parent=1 // pred_region
      %114 = dma.done [#allocation6], 512
    $region69: #{tpu_custom_call.1} parent=1 // pred_fallthru
      _
    // Predicated region
    $region70: #{tpu_custom_call.1} parent=1 // pred_check
      _
    $region71: #{tpu_custom_call.1} parent=1 // pred_check_branch
      %116 = sbr.rel (0) target = $region73
    $region72: #{tpu_custom_call.1} parent=1 // pred_region
      %118 = dma.done [#allocation6], 512
    $region73: #{tpu_custom_call.1} parent=1 // pred_fallthru
      _
    // Predicated region
    $region74: #{tpu_custom_call.1} parent=1 // pred_check
      _
    $region75: #{tpu_custom_call.1} parent=1 // pred_check_branch
      %120 = sbr.rel (0) target = $region77
    $region76: #{tpu_custom_call.1} parent=1 // pred_region
      %122 = dma.done [#allocation9], 512
    $region77: #{tpu_custom_call.1} parent=1 // pred_fallthru
      _
    // Predicated region
    $region78: #{tpu_custom_call.1} parent=1 // pred_check
      _
    $region79: #{tpu_custom_call.1} parent=1 // pred_check_branch
      %124 = sbr.rel (0) target = $region81
    $region80: #{tpu_custom_call.1} parent=1 // pred_region
      %126 = dma.done [#allocation9], 512
    $region81: #{tpu_custom_call.1} parent=1 // pred_fallthru
      _
    %v127 = vld [vmem:[%s0] sm:$0xff]
    %v128 = vld [vmem:[%s0 + $0x8] sm:$0xff]
    %v129 = vld [vmem:[%s0 + $0x10] sm:$0xff]
    %v130 = vld [vmem:[%s0 + $0x18] sm:$0xff]
    %v131 = vld [vmem:[%s0 + $0x20] sm:$0xff]
    %v132 = vld [vmem:[%s0 + $0x28] sm:$0xff]
    %v133 = vld [vmem:[%s0 + $0x30] sm:$0xff]
    %v134 = vld [vmem:[%s0 + $0x38] sm:$0xff]
    %v135 = vld [vmem:[%s2] sm:$0xff]
    %v136 = vld [vmem:[%s2 + $0x8] sm:$0xff]
    %v137 = vld [vmem:[%s2 + $0x10] sm:$0xff]
    %v138 = vld [vmem:[%s2 + $0x18] sm:$0xff]
    %v139 = vld [vmem:[%s2 + $0x20] sm:$0xff]
    %v140 = vld [vmem:[%s2 + $0x28] sm:$0xff]
    %v141 = vld [vmem:[%s2 + $0x30] sm:$0xff]
    %v142 = vld [vmem:[%s2 + $0x38] sm:$0xff]
    %v143 = vld [vmem:[%s2 + $0x40] sm:$0xff]
    %v144 = vld [vmem:[%s2 + $0x48] sm:$0xff]
    %v145 = vld [vmem:[%s2 + $0x50] sm:$0xff]
    %v146 = vld [vmem:[%s2 + $0x58] sm:$0xff]
    %v147 = vld [vmem:[%s2 + $0x60] sm:$0xff]
    %v148 = vld [vmem:[%s2 + $0x68] sm:$0xff]
    %v149 = vld [vmem:[%s2 + $0x70] sm:$0xff]
    %v150 = vld [vmem:[%s2 + $0x78] sm:$0xff]
    %v151 = vld [vmem:[%s3] sm:$0x1]
    %v153 = vperm.slane %v151, 0
    %155 = vmatpush.msra.mxu0 %v150
    %156 = vmatpush.msra.mxu0 %v149
    %157 = vmatpush.msra.mxu0 %v148
    %158 = vmatpush.msra.mxu0 %v147
    %159 = vmatpush.msra.mxu0 %v146
    %160 = vmatpush.msra.mxu0 %v145
    %161 = vmatpush.msra.mxu0 %v144
    %162 = vmatpush.msra.mxu0 %v143
    %163 = vmatpush.msra.mxu0 %v142
    %164 = vmatpush.msra.mxu0 %v141
    %165 = vmatpush.msra.mxu0 %v140
    %166 = vmatpush.msra.mxu0 %v139
    %167 = vmatpush.msra.mxu0 %v138
    %168 = vmatpush.msra.mxu0 %v137
    %169 = vmatpush.msra.mxu0 %v136
    %170 = vmatpush.msra.mxu0 %v135
    %171 = vmatmul.f32.gmra.mxu0 %v127
    %v172 = vpop.f32.mrf.mxu0
    %v173 = vadd.f32 %v153, %v172
    %174 = vmatmul.f32.gmra.mxu0 %v128
    %v175 = vpop.f32.mrf.mxu0
    %v176 = vadd.f32 %v153, %v175
    %177 = vmatmul.f32.gmra.mxu0 %v129
    %v178 = vpop.f32.mrf.mxu0
    %v179 = vadd.f32 %v153, %v178
    %180 = vmatmul.f32.gmra.mxu0 %v130
    %v181 = vpop.f32.mrf.mxu0
    %v182 = vadd.f32 %v153, %v181
    %183 = vmatmul.f32.gmra.mxu0 %v131
    %v184 = vpop.f32.mrf.mxu0
    %v185 = vadd.f32 %v153, %v184
    %186 = vmatmul.f32.gmra.mxu0 %v132
    %v187 = vpop.f32.mrf.mxu0
    %v188 = vadd.f32 %v153, %v187
    %189 = vmatmul.f32.gmra.mxu0 %v133
    %v190 = vpop.f32.mrf.mxu0
    %v191 = vadd.f32 %v153, %v190
    %192 = vmatmul.f32.gmra.mxu0 %v134
    %v193 = vpop.f32.mrf.mxu0
    %v194 = vadd.f32 %v153, %v193
    %195 = vdwg.mxu0
    %v196 = vld [vmem:[#allocation2] sm:$0xff]
    %197 = vmatpush.msra.mxu0 %v150
    %198 = vmatpush.msra.mxu0 %v149
    %199 = vmatpush.msra.mxu0 %v148
    %200 = vmatpush.msra.mxu0 %v147
    %201 = vmatpush.msra.mxu0 %v146
    %202 = vmatpush.msra.mxu0 %v145
    %203 = vmatpush.msra.mxu0 %v144
    %204 = vmatpush.msra.mxu0 %v143
    %205 = vmatpush.msra.mxu0 %v142
    %206 = vmatpush.msra.mxu0 %v141
    %207 = vmatpush.msra.mxu0 %v140
    %208 = vmatpush.msra.mxu0 %v139
    %209 = vmatpush.msra.mxu0 %v138
    %210 = vmatpush.msra.mxu0 %v137
    %211 = vmatpush.msra.mxu0 %v136
    %212 = vmatpush.msra.mxu0 %v135
    %213 = vmatmul.f32.gmra.mxu0 %v196
    %v214 = vpop.f32.mrf.mxu0
    %v215 = vadd.f32 %v153, %v214
    %216 = vdwg.mxu0
    %v217 = vld [vmem:[%s4] sm:$0xff]
    %v218 = vld [vmem:[%s4 + $0x8] sm:$0xff]
    %v219 = vld [vmem:[%s4 + $0x10] sm:$0xff]
    %v220 = vld [vmem:[%s4 + $0x18] sm:$0xff]
    %v221 = vld [vmem:[%s5] sm:$0x1]
    %v223 = vperm.slane %v221, 0
    %vm225 = vcmask 261120
    %v227 = vsel %vm225, %v215, 0
    %229 = vmatpush.msra.mxu0 0.0
    %230 = vmatpush.msra.mxu0 0.0
    %231 = vmatpush.msra.mxu0 0.0
    %232 = vmatpush.msra.mxu0 0.0
    %233 = vmatpush.msra.mxu0 0.0
    %234 = vmatpush.msra.mxu0 0.0
    %235 = vmatpush.msra.mxu0 0.0
    %236 = vmatpush.msra.mxu0 0.0
    %237 = vmatpush.msra.mxu0 0.0
    %238 = vmatpush.msra.mxu0 0.0
    %239 = vmatpush.msra.mxu0 0.0
    %240 = vmatpush.msra.mxu0 0.0
    %241 = vmatpush.msra.mxu0 %v220
    %242 = vmatpush.msra.mxu0 %v219
    %243 = vmatpush.msra.mxu0 %v218
    %244 = vmatpush.msra.mxu0 %v217
    %245 = vmatmul.f32.gmra.mxu0 %v227
    %v246 = vpop.f32.mrf.mxu0
    %v247 = vadd.f32 %v223, %v246
    %248 = vdwg.mxu0
    %v249 = vmul.f32 %v247, 0.17677669
    %v250 = vld [vmem:[#allocation5] sm:$0xff]
    %v251 = vld [vmem:[#allocation5 + $0x8] sm:$0xff]
    %v252 = vld [vmem:[#allocation5 + $0x10] sm:$0xff]
    %v253 = vld [vmem:[#allocation5 + $0x18] sm:$0xff]
    %v254 = vld [vmem:[%s7] sm:$0x1]
    %v256 = vperm.slane %v254, 0
    %v259 = vsel %vm225, %v173, 0
    %v262 = vsel %vm225, %v176, 0
    %v265 = vsel %vm225, %v179, 0
    %v268 = vsel %vm225, %v182, 0
    %v271 = vsel %vm225, %v185, 0
    %v274 = vsel %vm225, %v188, 0
    %v277 = vsel %vm225, %v191, 0
    %v280 = vsel %vm225, %v194, 0
    %282 = vmatpush.msra.mxu0 0.0
    %283 = vmatpush.msra.mxu0 0.0
    %284 = vmatpush.msra.mxu0 0.0
    %285 = vmatpush.msra.mxu0 0.0
    %286 = vmatpush.msra.mxu0 0.0
    %287 = vmatpush.msra.mxu0 0.0
    %288 = vmatpush.msra.mxu0 0.0
    %289 = vmatpush.msra.mxu0 0.0
    %290 = vmatpush.msra.mxu0 0.0
    %291 = vmatpush.msra.mxu0 0.0
    %292 = vmatpush.msra.mxu0 0.0
    %293 = vmatpush.msra.mxu0 0.0
    %294 = vmatpush.msra.mxu0 %v253
    %295 = vmatpush.msra.mxu0 %v252
    %296 = vmatpush.msra.mxu0 %v251
    %297 = vmatpush.msra.mxu0 %v250
    %298 = vmatmul.f32.gmra.mxu0 %v259
    %v299 = vpop.f32.mrf.mxu0
    %v300 = vadd.f32 %v256, %v299
    %301 = vmatmul.f32.gmra.mxu0 %v262
    %v302 = vpop.f32.mrf.mxu0
    %v303 = vadd.f32 %v256, %v302
    %304 = vmatmul.f32.gmra.mxu0 %v265
    %v305 = vpop.f32.mrf.mxu0
    %v306 = vadd.f32 %v256, %v305
    %307 = vmatmul.f32.gmra.mxu0 %v268
    %v308 = vpop.f32.mrf.mxu0
    %v309 = vadd.f32 %v256, %v308
    %310 = vmatmul.f32.gmra.mxu0 %v271
    %v311 = vpop.f32.mrf.mxu0
    %v312 = vadd.f32 %v256, %v311
    %313 = vmatmul.f32.gmra.mxu0 %v274
    %v314 = vpop.f32.mrf.mxu0
    %v315 = vadd.f32 %v256, %v314
    %316 = vmatmul.f32.gmra.mxu0 %v277
    %v317 = vpop.f32.mrf.mxu0
    %v318 = vadd.f32 %v256, %v317
    %319 = vmatmul.f32.gmra.mxu0 %v280
    %v320 = vpop.f32.mrf.mxu0
    %v321 = vadd.f32 %v256, %v320
    %322 = vdwg.mxu0
    %v323 = vld [vmem:[#allocation7] sm:$0xff]
    %v324 = vld [vmem:[#allocation7 + $0x8] sm:$0xff]
    %v325 = vld [vmem:[#allocation7 + $0x10] sm:$0xff]
    %v326 = vld [vmem:[#allocation7 + $0x18] sm:$0xff]
    %v327 = vld [vmem:[%s9] sm:$0x1]
    %v329 = vperm.slane %v327, 0
    %331 = vmatpush.msra.mxu0 0.0
    %332 = vmatpush.msra.mxu0 0.0
    %333 = vmatpush.msra.mxu0 0.0
    %334 = vmatpush.msra.mxu0 0.0
    %335 = vmatpush.msra.mxu0 0.0
    %336 = vmatpush.msra.mxu0 0.0
    %337 = vmatpush.msra.mxu0 0.0
    %338 = vmatpush.msra.mxu0 0.0
    %339 = vmatpush.msra.mxu0 0.0
    %340 = vmatpush.msra.mxu0 0.0
    %341 = vmatpush.msra.mxu0 0.0
    %342 = vmatpush.msra.mxu0 0.0
    %343 = vmatpush.msra.mxu0 %v326
    %344 = vmatpush.msra.mxu0 %v325
    %345 = vmatpush.msra.mxu0 %v324
    %346 = vmatpush.msra.mxu0 %v323
    %347 = vmatmul.f32.gmra.mxu0 %v259
    %v348 = vpop.f32.mrf.mxu0
    %v349 = vadd.f32 %v329, %v348
    %350 = vmatmul.f32.gmra.mxu0 %v262
    %v351 = vpop.f32.mrf.mxu0
    %v352 = vadd.f32 %v329, %v351
    %353 = vmatmul.f32.gmra.mxu0 %v265
    %v354 = vpop.f32.mrf.mxu0
    %v355 = vadd.f32 %v329, %v354
    %356 = vmatmul.f32.gmra.mxu0 %v268
    %v357 = vpop.f32.mrf.mxu0
    %v358 = vadd.f32 %v329, %v357
    %359 = vmatmul.f32.gmra.mxu0 %v271
    %v360 = vpop.f32.mrf.mxu0
    %v361 = vadd.f32 %v329, %v360
    %362 = vmatmul.f32.gmra.mxu0 %v274
    %v363 = vpop.f32.mrf.mxu0
    %v364 = vadd.f32 %v329, %v363
    %365 = vmatmul.f32.gmra.mxu0 %v277
    %v366 = vpop.f32.mrf.mxu0
    %v367 = vadd.f32 %v329, %v366
    %368 = vmatmul.f32.gmra.mxu0 %v280
    %v369 = vpop.f32.mrf.mxu0
    %v370 = vadd.f32 %v329, %v369
    %371 = vdwg.mxu0
    %v373 = vrot.slane %v249, 1
    %v374 = vrot.slane %v249, 2
    %v375 = vrot.slane %v249, 3
    %v376 = vrot.slane %v249, 4
    %v377 = vrot.slane %v249, 5
    %v378 = vrot.slane %v249, 6
    %v379 = vrot.slane %v249, 7
    %v380 = vperm.slane %v249, 0
    %v381 = vperm.slane %v373, 0
    %v382 = vperm.slane %v374, 0
    %v383 = vperm.slane %v375, 0
    %v384 = vperm.slane %v376, 0
    %v385 = vperm.slane %v377, 0
    %v386 = vperm.slane %v378, 0
    %v387 = vperm.slane %v379, 0
    %v396 = vmul.f32 %v380, %v300
    %v397 = vmul.f32 %v381, %v303
    %v398 = vmul.f32 %v382, %v306
    %v399 = vmul.f32 %v383, %v309
    %v400 = vmul.f32 %v384, %v312
    %v401 = vmul.f32 %v385, %v315
    %v402 = vmul.f32 %v386, %v318
    %v403 = vmul.f32 %v387, %v321
    %v404 = vsel %vm225, %v396, 0.0
    %405 = vadd.xlane.f32.xlu0 %v404
    %v406 = vpop.xlane.xlu0 %405
    %v407 = vsel %vm225, %v397, 0.0
    %408 = vadd.xlane.f32.xlu0 %v407
    %v409 = vpop.xlane.xlu0 %408
    %v410 = vsel %vm225, %v398, 0.0
    %411 = vadd.xlane.f32.xlu0 %v410
    %v412 = vpop.xlane.xlu0 %411
    %v413 = vsel %vm225, %v399, 0.0
    %414 = vadd.xlane.f32.xlu0 %v413
    %v415 = vpop.xlane.xlu0 %414
    %v416 = vsel %vm225, %v400, 0.0
    %417 = vadd.xlane.f32.xlu0 %v416
    %v418 = vpop.xlane.xlu0 %417
    %v419 = vsel %vm225, %v401, 0.0
    %420 = vadd.xlane.f32.xlu0 %v419
    %v421 = vpop.xlane.xlu0 %420
    %v422 = vsel %vm225, %v402, 0.0
    %423 = vadd.xlane.f32.xlu0 %v422
    %v424 = vpop.xlane.xlu0 %423
    %v425 = vsel %vm225, %v403, 0.0
    %426 = vadd.xlane.f32.xlu0 %v425
    %v427 = vpop.xlane.xlu0 %426
    %v428 = vrot.slane %v406, 4
    %v429 = vmax.f32 %v406, %v428
    %v430 = vrot.slane %v429, 2
    %v431 = vmax.f32 %v429, %v430
    %v432 = vrot.slane %v431, 1
    %v433 = vmax.f32 %v431, %v432
    %v434 = vrot.slane %v409, 4
    %v435 = vmax.f32 %v409, %v434
    %v436 = vrot.slane %v435, 2
    %v437 = vmax.f32 %v435, %v436
    %v438 = vrot.slane %v437, 1
    %v439 = vmax.f32 %v437, %v438
    %v440 = vrot.slane %v412, 4
    %v441 = vmax.f32 %v412, %v440
    %v442 = vrot.slane %v441, 2
    %v443 = vmax.f32 %v441, %v442
    %v444 = vrot.slane %v443, 1
    %v445 = vmax.f32 %v443, %v444
    %v446 = vrot.slane %v415, 4
    %v447 = vmax.f32 %v415, %v446
    %v448 = vrot.slane %v447, 2
    %v449 = vmax.f32 %v447, %v448
    %v450 = vrot.slane %v449, 1
    %v451 = vmax.f32 %v449, %v450
    %v452 = vrot.slane %v418, 4
    %v453 = vmax.f32 %v418, %v452
    %v454 = vrot.slane %v453, 2
    %v455 = vmax.f32 %v453, %v454
    %v456 = vrot.slane %v455, 1
    %v457 = vmax.f32 %v455, %v456
    %v458 = vrot.slane %v421, 4
    %v459 = vmax.f32 %v421, %v458
    %v460 = vrot.slane %v459, 2
    %v461 = vmax.f32 %v459, %v460
    %v462 = vrot.slane %v461, 1
    %v463 = vmax.f32 %v461, %v462
    %v464 = vrot.slane %v424, 4
    %v465 = vmax.f32 %v424, %v464
    %v466 = vrot.slane %v465, 2
    %v467 = vmax.f32 %v465, %v466
    %v468 = vrot.slane %v467, 1
    %v469 = vmax.f32 %v467, %v468
    %v470 = vrot.slane %v427, 4
    %v471 = vmax.f32 %v427, %v470
    %v472 = vrot.slane %v471, 2
    %v473 = vmax.f32 %v471, %v472
    %v474 = vrot.slane %v473, 1
    %v475 = vmax.f32 %v473, %v474
    %v476 = vsub.f32 %v406, %v433
    %v477 = vsub.f32 %v409, %v439
    %v478 = vsub.f32 %v412, %v445
    %v479 = vsub.f32 %v415, %v451
    %v480 = vsub.f32 %v418, %v457
    %v481 = vsub.f32 %v421, %v463
    %v482 = vsub.f32 %v424, %v469
    %v483 = vsub.f32 %v427, %v475
    %v484 = vmul.f32 %v476, 1.442695
    %v485 = vpow.pop %v484
    %v486 = vmul.f32 %v477, 1.442695
    %v487 = vpow.pop %v486
    %v488 = vmul.f32 %v478, 1.442695
    %v489 = vpow.pop %v488
    %v490 = vmul.f32 %v479, 1.442695
    %v491 = vpow.pop %v490
    %v492 = vmul.f32 %v480, 1.442695
    %v493 = vpow.pop %v492
    %v494 = vmul.f32 %v481, 1.442695
    %v495 = vpow.pop %v494
    %v496 = vmul.f32 %v482, 1.442695
    %v497 = vpow.pop %v496
    %v498 = vmul.f32 %v483, 1.442695
    %v499 = vpow.pop %v498
    %v500 = vrot.slane %v485, 4
    %v501 = vadd.f32 %v485, %v500
    %v502 = vrot.slane %v501, 2
    %v503 = vadd.f32 %v501, %v502
    %v504 = vrot.slane %v503, 1
    %v505 = vadd.f32 %v503, %v504
    %v506 = vrot.slane %v487, 4
    %v507 = vadd.f32 %v487, %v506
    %v508 = vrot.slane %v507, 2
    %v509 = vadd.f32 %v507, %v508
    %v510 = vrot.slane %v509, 1
    %v511 = vadd.f32 %v509, %v510
    %v512 = vrot.slane %v489, 4
    %v513 = vadd.f32 %v489, %v512
    %v514 = vrot.slane %v513, 2
    %v515 = vadd.f32 %v513, %v514
    %v516 = vrot.slane %v515, 1
    %v517 = vadd.f32 %v515, %v516
    %v518 = vrot.slane %v491, 4
    %v519 = vadd.f32 %v491, %v518
    %v520 = vrot.slane %v519, 2
    %v521 = vadd.f32 %v519, %v520
    %v522 = vrot.slane %v521, 1
    %v523 = vadd.f32 %v521, %v522
    %v524 = vrot.slane %v493, 4
    %v525 = vadd.f32 %v493, %v524
    %v526 = vrot.slane %v525, 2
    %v527 = vadd.f32 %v525, %v526
    %v528 = vrot.slane %v527, 1
    %v529 = vadd.f32 %v527, %v528
    %v530 = vrot.slane %v495, 4
    %v531 = vadd.f32 %v495, %v530
    %v532 = vrot.slane %v531, 2
    %v533 = vadd.f32 %v531, %v532
    %v534 = vrot.slane %v533, 1
    %v535 = vadd.f32 %v533, %v534
    %v536 = vrot.slane %v497, 4
    %v537 = vadd.f32 %v497, %v536
    %v538 = vrot.slane %v537, 2
    %v539 = vadd.f32 %v537, %v538
    %v540 = vrot.slane %v539, 1
    %v541 = vadd.f32 %v539, %v540
    %v542 = vrot.slane %v499, 4
    %v543 = vadd.f32 %v499, %v542
    %v544 = vrot.slane %v543, 2
    %v545 = vadd.f32 %v543, %v544
    %v546 = vrot.slane %v545, 1
    %v547 = vadd.f32 %v545, %v546
    %v548 = vrcp.pop %v505
    %v549 = vrcp.pop %v511
    %v550 = vrcp.pop %v517
    %v551 = vrcp.pop %v523
    %v552 = vrcp.pop %v529
    %v553 = vrcp.pop %v535
    %v554 = vrcp.pop %v541
    %v555 = vrcp.pop %v547
    %v556 = vmul.f32 %v485, %v548
    %v557 = vmul.f32 %v487, %v549
    %v558 = vmul.f32 %v489, %v550
    %v559 = vmul.f32 %v491, %v551
    %v560 = vmul.f32 %v493, %v552
    %v561 = vmul.f32 %v495, %v553
    %v562 = vmul.f32 %v497, %v554
    %v563 = vmul.f32 %v499, %v555
    %v564 = vmul.f32 %v556, %v349
    %v565 = vmul.f32 %v557, %v352
    %v566 = vmul.f32 %v558, %v355
    %v567 = vmul.f32 %v559, %v358
    %v568 = vmul.f32 %v560, %v361
    %v569 = vmul.f32 %v561, %v364
    %v570 = vmul.f32 %v562, %v367
    %v571 = vmul.f32 %v563, %v370
    %v572 = vsel %vm225, %v564, 0.0
    %v573 = vrot.slane %v572, 4
    %v574 = vadd.f32 %v572, %v573
    %v575 = vrot.slane %v574, 2
    %v576 = vadd.f32 %v574, %v575
    %v577 = vrot.slane %v576, 1
    %v578 = vadd.f32 %v576, %v577
    %v579 = vsel %vm225, %v565, 0.0
    %v580 = vrot.slane %v579, 4
    %v581 = vadd.f32 %v579, %v580
    %v582 = vrot.slane %v581, 2
    %v583 = vadd.f32 %v581, %v582
    %v584 = vrot.slane %v583, 1
    %v585 = vadd.f32 %v583, %v584
    %v586 = vsel %vm225, %v566, 0.0
    %v587 = vrot.slane %v586, 4
    %v588 = vadd.f32 %v586, %v587
    %v589 = vrot.slane %v588, 2
    %v590 = vadd.f32 %v588, %v589
    %v591 = vrot.slane %v590, 1
    %v592 = vadd.f32 %v590, %v591
    %v593 = vsel %vm225, %v567, 0.0
    %v594 = vrot.slane %v593, 4
    %v595 = vadd.f32 %v593, %v594
    %v596 = vrot.slane %v595, 2
    %v597 = vadd.f32 %v595, %v596
    %v598 = vrot.slane %v597, 1
    %v599 = vadd.f32 %v597, %v598
    %v600 = vsel %vm225, %v568, 0.0
    %v601 = vrot.slane %v600, 4
    %v602 = vadd.f32 %v600, %v601
    %v603 = vrot.slane %v602, 2
    %v604 = vadd.f32 %v602, %v603
    %v605 = vrot.slane %v604, 1
    %v606 = vadd.f32 %v604, %v605
    %v607 = vsel %vm225, %v569, 0.0
    %v608 = vrot.slane %v607, 4
    %v609 = vadd.f32 %v607, %v608
    %v610 = vrot.slane %v609, 2
    %v611 = vadd.f32 %v609, %v610
    %v612 = vrot.slane %v611, 1
    %v613 = vadd.f32 %v611, %v612
    %v614 = vsel %vm225, %v570, 0.0
    %v615 = vrot.slane %v614, 4
    %v616 = vadd.f32 %v614, %v615
    %v617 = vrot.slane %v616, 2
    %v618 = vadd.f32 %v616, %v617
    %v619 = vrot.slane %v618, 1
    %v620 = vadd.f32 %v618, %v619
    %v621 = vsel %vm225, %v571, 0.0
    %v622 = vrot.slane %v621, 4
    %v623 = vadd.f32 %v621, %v622
    %v624 = vrot.slane %v623, 2
    %v625 = vadd.f32 %v623, %v624
    %v626 = vrot.slane %v625, 1
    %v627 = vadd.f32 %v625, %v626
    %v628 = vld [vmem:[#allocation8] sm:$0xff]
    %v629 = vld [vmem:[#allocation8 + $0x8] sm:$0xff]
    %v630 = vld [vmem:[#allocation8 + $0x10] sm:$0xff]
    %v631 = vld [vmem:[#allocation8 + $0x18] sm:$0xff]
    %v632 = vld [vmem:[#allocation10] sm:$0xff]
    %v633 = vld [vmem:[#allocation10 + $0x8] sm:$0xff]
    %v634 = vld [vmem:[#allocation10 + $0x10] sm:$0xff]
    %v635 = vld [vmem:[#allocation10 + $0x18] sm:$0xff]
    %636 = vmatpush.msra.mxu0 0.0
    %637 = vmatpush.msra.mxu0 0.0
    %638 = vmatpush.msra.mxu0 0.0
    %639 = vmatpush.msra.mxu0 0.0
    %640 = vmatpush.msra.mxu0 0.0
    %641 = vmatpush.msra.mxu0 0.0
    %642 = vmatpush.msra.mxu0 0.0
    %643 = vmatpush.msra.mxu0 0.0
    %644 = vmatpush.msra.mxu0 0.0
    %645 = vmatpush.msra.mxu0 0.0
    %646 = vmatpush.msra.mxu0 0.0
    %647 = vmatpush.msra.mxu0 0.0
    %648 = vmatpush.msra.mxu0 %v635
    %649 = vmatpush.msra.mxu0 %v634
    %650 = vmatpush.msra.mxu0 %v633
    %651 = vmatpush.msra.mxu0 %v632
    %652 = vmatmul.f32.gmra.mxu0 %v227
    %v653 = vpop.f32.mrf.mxu0
    %v654 = vadd.f32 0.0, %v653
    %655 = vdwg.mxu0
    %vm664 = vcmask 1041409
    %v665 = vsel %vm664, %v585, %v578
    %vm666 = vcmask 1042434
    %v667 = vsel %vm666, %v592, %v665
    %vm668 = vcmask 1043459
    %v669 = vsel %vm668, %v599, %v667
    %vm670 = vcmask 1044484
    %v671 = vsel %vm670, %v606, %v669
    %vm672 = vcmask 1045509
    %v673 = vsel %vm672, %v613, %v671
    %vm674 = vcmask 1046534
    %v675 = vsel %vm674, %v620, %v673
    %vm676 = vcmask 1047559
    %v677 = vsel %vm676, %v627, %v675
    %v678 = vsel %vm225, %v677, 0
    %680 = vmatpush.msra.mxu0 0.0
    %681 = vmatpush.msra.mxu0 0.0
    %682 = vmatpush.msra.mxu0 0.0
    %683 = vmatpush.msra.mxu0 0.0
    %684 = vmatpush.msra.mxu0 0.0
    %685 = vmatpush.msra.mxu0 0.0
    %686 = vmatpush.msra.mxu0 0.0
    %687 = vmatpush.msra.mxu0 0.0
    %688 = vmatpush.msra.mxu0 0.0
    %689 = vmatpush.msra.mxu0 0.0
    %690 = vmatpush.msra.mxu0 0.0
    %691 = vmatpush.msra.mxu0 0.0
    %692 = vmatpush.msra.mxu0 %v631
    %693 = vmatpush.msra.mxu0 %v630
    %694 = vmatpush.msra.mxu0 %v629
    %695 = vmatpush.msra.mxu0 %v628
    %696 = vmatmul.f32.gmra.mxu0 %v678
    %v697 = vpop.f32.mrf.mxu0
    %v698 = vadd.f32 %v654, %v697
    %699 = vdwg.mxu0
    %v700 = vld [vmem:[%s12] sm:$0x1]
    %v702 = vperm.slane %v700, 0
    %v704 = vadd.f32 %v698, %v702
    %v705 = vmax.f32 %v704, 0.0
    %v706 = vld [vmem:[%s13] sm:$0xff]
    %v707 = vld [vmem:[%s13 + $0x8] sm:$0xff]
    %v708 = vld [vmem:[%s13 + $0x10] sm:$0xff]
    %v709 = vld [vmem:[%s13 + $0x18] sm:$0xff]
    %v710 = vld [vmem:[%s13 + $0x20] sm:$0xff]
    %v711 = vld [vmem:[%s13 + $0x28] sm:$0xff]
    %v712 = vld [vmem:[%s13 + $0x30] sm:$0xff]
    %v713 = vld [vmem:[%s13 + $0x38] sm:$0xff]
    %v714 = vld [vmem:[%s14] sm:$0x1]
    %v716 = vperm.slane %v714, 0
    %vm718 = vcmask 523264
    %v720 = vsel %vm718, %v705, 0
    %722 = vmatpush.msra.mxu0 0.0
    %723 = vmatpush.msra.mxu0 0.0
    %724 = vmatpush.msra.mxu0 0.0
    %725 = vmatpush.msra.mxu0 0.0
    %726 = vmatpush.msra.mxu0 0.0
    %727 = vmatpush.msra.mxu0 0.0
    %728 = vmatpush.msra.mxu0 0.0
    %729 = vmatpush.msra.mxu0 0.0
    %730 = vmatpush.msra.mxu0 %v713
    %731 = vmatpush.msra.mxu0 %v712
    %732 = vmatpush.msra.mxu0 %v711
    %733 = vmatpush.msra.mxu0 %v710
    %734 = vmatpush.msra.mxu0 %v709
    %735 = vmatpush.msra.mxu0 %v708
    %736 = vmatpush.msra.mxu0 %v707
    %737 = vmatpush.msra.mxu0 %v706
    %738 = vmatmul.f32.gmra.mxu0 %v720
    %v739 = vpop.f32.mrf.mxu0
    %v740 = vadd.f32 %v716, %v739
    %741 = vdwg.mxu0
    %v742 = vadd.f32 %v196, %v740
    %743 = vst [vmem:[#allocation11] sm:$0xff] %v742
    // Predicated region
    $region82: #{tpu_custom_call.1} parent=1 // pred_check
      _
    $region83: #{tpu_custom_call.1} parent=1 // pred_check_branch
      %745 = sbr.rel (0) target = $region85
    $region84: #{tpu_custom_call.1} parent=1 // pred_region
      %747 = vsyncadd [#allocation4], 0
      %s749 = sshll.u32 [#allocation11], 4
      %s750 = int_to_ptr.vmem [resolvable:$true] %s749
      %s751 = sshll.u32 %s15, 4
      %s752 = int_to_ptr.hbm [resolvable:$true] %s751
      %754 = dma.vmem_to_hbm [thread:$0]  %s750, 128, %s752, [#allocation4]
    $region85: #{tpu_custom_call.1} parent=1 // pred_fallthru
      _
    // Predicated region
    $region86: #{tpu_custom_call.1} parent=1 // pred_check
      _
    $region87: #{tpu_custom_call.1} parent=1 // pred_check_branch
      %756 = sbr.rel (0) target = $region89
    $region88: #{tpu_custom_call.1} parent=1 // pred_region
      %758 = dma.done [#allocation4], 128
    $region89: #{tpu_custom_call.1} parent=1 // pred_fallthru
      _
    %759 = vsyncpa [#allocation3], 1
    %760 = vsyncpa [#allocation6], 1
    %761 = vsyncpa [#allocation9], 1
    %762 = vsyncpa [#allocation4], 1

</llo_original>
